<compile_context>
chip_gen: v6e
topology: v6e:2x2x1
jax: 0.10.0
libtpu: 0.0.40
codegen_flags: <defaults>
</compile_context>

<pallas_src>
import functools

import jax
import jax.numpy as jnp
import numpy as np
from jax.experimental import pallas as pl
from jax.experimental.pallas import tpu as pltpu

LN_EPS = 1e-5  # PyTorch nn.LayerNorm default


def _cdiv(a, b):
    return (a + b - 1) // b


def _round_up(x, m):
    return ((x + m - 1) // m) * m


def _tile_bytes(rows, cols, itemsize):
    """VMEM footprint of a (rows, cols) tile with real (8,128) layout padding."""
    return _round_up(max(rows, 1), 8) * _round_up(max(cols, 1), 128) * itemsize


def _mlp_resnet_block_kernel(x_ref, g_ref, b_ref, w1_ref, b1_ref, w2_ref, b2_ref,
                             o_ref, xn_ref, acc_ref):
    """Fused LayerNorm + MLP(SiLU) + residual for one (row-tile, hidden-tile) step."""
    k = pl.program_id(1)

    @pl.when(k == 0)
    def _():
        x = x_ref[...].astype(jnp.float32)
        # One-pass LN stats: sum and sum-of-squares are independent lane reductions.
        d_inv = 1.0 / x.shape[-1]
        s = jnp.sum(x, axis=-1, keepdims=True)
        ssq = jnp.sum(x * x, axis=-1, keepdims=True)
        mean = s * d_inv
        var = jnp.maximum(ssq * d_inv - mean * mean, 0.0)
        xn = (x - mean) * jax.lax.rsqrt(var + LN_EPS)
        xn_ref[...] = (xn * g_ref[...] + b_ref[...]).astype(xn_ref.dtype)
        acc_ref[...] = jnp.zeros_like(acc_ref)

    # --- Linear(D -> TH) + SiLU on this hidden tile, f32 accumulation on the MXU ---
    h = jnp.dot(xn_ref[...], w1_ref[...],
                preferred_element_type=jnp.float32) + b1_ref[...]
    h = h * jax.nn.sigmoid(h)                 # SiLU (sigmoid goes to the EUP)

    # --- Linear(TH -> D), accumulate into the f32 output accumulator ---
    acc_ref[...] += jnp.dot(h.astype(w2_ref.dtype), w2_ref[...],
                            preferred_element_type=jnp.float32)

    @pl.when(k == pl.num_programs(1) - 1)
    def _():
        # Dropout (eval: identity) + residual.
        y = acc_ref[...] + b2_ref[...] + x_ref[...].astype(jnp.float32)
        o_ref[...] = y.astype(o_ref.dtype)


def _vmem_estimate(tm, th, D, x_bytes, w_bytes, w_bufs):
    return (4 * _tile_bytes(tm, D, x_bytes)                              # x + out (2x buffered)
            + w_bufs * (_tile_bytes(D, th, w_bytes)
                        + _tile_bytes(th, D, w_bytes))                   # W1 / W2 tiles
            + _tile_bytes(tm, D, w_bytes)                                # cached LN scratch
            + _tile_bytes(tm, D, 4)                                      # f32 accumulator
            + 2 * _tile_bytes(tm, max(D, th), 4)                         # h + f32 temporaries
            + 6 * _tile_bytes(1, max(D, th), 4))                         # bias/scale rows


def _tpu_vmem_and_cores():
    vmem = 128 * 1024 * 1024
    try:
        info = pltpu.get_tpu_info()
        vmem = int(getattr(info, "vmem_capacity_bytes", vmem))
    except Exception:
        pass
    num_tc = 1
    try:
        num_tc = max(1, int(getattr(jax.devices()[0], "num_cores", 1)))
    except Exception:
        pass
    if vmem <= 64 * 1024 * 1024:   # 64 MiB/TC parts (v7x-like) expose 2 TensorCores
        num_tc = max(num_tc, 2)
    return vmem, num_tc


def _pick_tiles(n_rows, D, H, x_bytes, w_bytes, budget, num_tc):
    # ---- hidden (H) tile: keep full weights resident (single-buffered) when they fit
    #      comfortably, otherwise stream H in multiples of 128 (double-buffered).
    def w_pair(th, bufs):
        return bufs * (_tile_bytes(D, th, w_bytes) + _tile_bytes(th, D, w_bytes))

    if w_pair(H, 1) <= budget // 3:
        th, h_steps = H, 1
    else:
        th = 128
        while th * 2 < H and w_pair(th * 2, 2) <= budget // 3:
            th *= 2
        h_steps = _cdiv(H, th)
    w_bufs = 1 if h_steps == 1 else 2

    # ---- row (M) tile: biggest that fits the budget (max 2048), then keep enough
    #      steps to feed the DMA pipeline / both TensorCores.
    tm = 2048
    while tm > 8 and _vmem_estimate(tm, th, D, x_bytes, w_bytes, w_bufs) > budget:
        tm //= 2
    desired_steps = 8 if num_tc >= 2 else 4        # v5e/v6e: fewer, larger tiles
    if n_rows >= desired_steps * 64:
        tm = min(tm, max(8, _round_up(_cdiv(n_rows, desired_steps), 8)))
    tm = max(8, min(tm, _round_up(n_rows, 8)))
    steps = _cdiv(n_rows, tm)
    if num_tc >= 2 and steps > 1 and steps % 2 == 1:   # even step count for 2 TCs
        tm = max(8, _round_up(_cdiv(n_rows, steps + 1), 8))
    return tm, th, h_steps


@functools.partial(jax.jit, static_argnames=("block_rows", "h_block", "matmul_dtype"))
def mlp_resnet_block_v2(x, gamma, beta, w1, b1, w2, b2, block_rows=None,
                        h_block=None, matmul_dtype=None):
    """x: (..., D) float array. Returns same shape/dtype (eval-mode forward)."""
    D = x.shape[-1]
    H = w1.shape[-1]
    orig_shape = x.shape
    x2 = x.reshape(-1, D)
    N = x2.shape[0]

    # Opt-in low-precision MXU path (cast once in the wrapper; accumulation stays f32).
    if matmul_dtype is not None:
        w1 = w1.astype(matmul_dtype)
        w2 = w2.astype(matmul_dtype)
    mm_dtype = w1.dtype

    vmem_cap, num_tc = _tpu_vmem_and_cores()
    budget = int(vmem_cap * 0.6)
    x_bytes = jnp.dtype(x.dtype).itemsize
    w_bytes = jnp.dtype(mm_dtype).itemsize

    tm, th, h_steps = _pick_tiles(N, D, H, x_bytes, w_bytes, budget, num_tc)
    if block_rows is not None:
        tm = max(8, _round_up(int(block_rows), 8))
    if h_block is not None:
        th = min(_round_up(int(h_block), 128), _round_up(H, 128))
        h_steps = _cdiv(H, th)
    w_bufs = 1 if h_steps == 1 else 2

    est = _vmem_estimate(tm, th, D, x_bytes, w_bytes, w_bufs)
    vmem_limit = int(min(max(est * 5 // 4, 32 << 20), int(vmem_cap * 0.9)))

    # Pad the row count so the grid tiles it exactly (padded rows are sliced off).
    n_pad = _round_up(max(N, 1), tm)
    if n_pad != N:
        x2 = jnp.pad(x2, ((0, n_pad - N), (0, 0)))

    # Hidden-dim zero padding when streaming H (exact: padded columns contribute nothing).
    h_pad = th * h_steps
    if h_pad != H:
        w1 = jnp.pad(w1, ((0, 0), (0, h_pad - H)))
        b1 = jnp.pad(b1, ((0, h_pad - H),))
        w2 = jnp.pad(w2, ((0, h_pad - H), (0, 0)))

    # Small 1-D params -> 2-D f32 rows (satisfies last-two-dims tiling rules).
    g2 = gamma.reshape(1, D).astype(jnp.float32)
    be2 = beta.reshape(1, D).astype(jnp.float32)
    b1_2 = b1.reshape(1, h_pad).astype(jnp.float32)
    b2_2 = b2.reshape(1, D).astype(jnp.float32)

    # Constant-index blocks have nothing to pipeline: single-buffer them (saves VMEM).
    const1 = dict(pipeline_mode=pl.Buffered(1))
    w_mode = const1 if h_steps == 1 else {}   # weight tiles stream when H is tiled

    grid = (n_pad // tm, h_steps)

    cost = pl.CostEstimate(
        flops=int(4 * N * D * H),
        transcendentals=int(N * H + N),
        bytes_accessed=int(N * D * 2 * x_bytes + 2 * D * H * w_bytes + (3 * D + H) * 4),
    )

    out = pl.pallas_call(
        _mlp_resnet_block_kernel,
        out_shape=jax.ShapeDtypeStruct((n_pad, D), x.dtype),
        grid_spec=pltpu.PrefetchScalarGridSpec(
            num_scalar_prefetch=0,
            grid=grid,
            in_specs=[
                pl.BlockSpec((tm, D), lambda i, k: (i, 0)),              # x rows
                pl.BlockSpec((1, D), lambda i, k: (0, 0), **const1),     # gamma
                pl.BlockSpec((1, D), lambda i, k: (0, 0), **const1),     # beta
                pl.BlockSpec((D, th), lambda i, k: (0, k), **w_mode),    # W1 tile
                pl.BlockSpec((1, th), lambda i, k: (0, k), **w_mode),    # b1 tile
                pl.BlockSpec((th, D), lambda i, k: (k, 0), **w_mode),    # W2 tile
                pl.BlockSpec((1, D), lambda i, k: (0, 0), **const1),     # b2
            ],
            out_specs=pl.BlockSpec((tm, D), lambda i, k: (i, 0)),
            scratch_shapes=[
                pltpu.VMEM((tm, D), mm_dtype),     # cached LayerNorm output
                pltpu.VMEM((tm, D), jnp.float32),  # f32 output accumulator
            ],
        ),
        compiler_params=pltpu.CompilerParams(
            dimension_semantics=("parallel", "arbitrary"),
            vmem_limit_bytes=vmem_limit,
        ),
        cost_estimate=cost,
    )(x2, g2, be2, w1, b1_2, w2, b2_2)

    if n_pad != N:
        out = out[:N]
    return out.reshape(orig_shape)


def _reference(x, gamma, beta, w1, b1, w2, b2):
    """Pure-JAX reference matching PyTorch eval-mode forward."""
    xf = x.astype(jnp.float32)
    mean = jnp.mean(xf, axis=-1, keepdims=True)
    var = jnp.mean((xf - mean) ** 2, axis=-1, keepdims=True)
    xn = (xf - mean) / jnp.sqrt(var + LN_EPS) * gamma + beta
    h = xn @ w1.astype(jnp.float32) + b1
    h = h * jax.nn.sigmoid(h)
    y = h @ w2.astype(jnp.float32) + b2
    return (y + xf).astype(x.dtype)


def _make_params(key, dim, hidden):
    kg, kb, kw1, kb1, kw2, kb2 = jax.random.split(key, 6)
    gamma = jnp.ones((dim,), jnp.float32) + 0.01 * jax.random.normal(kg, (dim,))
    beta = 0.01 * jax.random.normal(kb, (dim,))
    w1 = jax.random.normal(kw1, (dim, hidden), jnp.float32) / np.sqrt(dim)
    b1 = 0.01 * jax.random.normal(kb1, (hidden,))
    w2 = jax.random.normal(kw2, (hidden, dim), jnp.float32) / np.sqrt(hidden)
    b2 = 0.01 * jax.random.normal(kb2, (dim,))
    return gamma, beta, w1, b1, w2, b2


if __name__ == "__main__":
    key = jax.random.PRNGKey(0)

    # --- Test 1: module-consistent small shapes (dim=32, expansion=4 -> hidden=128) ---
    batch, seq, dim = 2, 8, 32
    hidden = dim * 4
    kx, kp = jax.random.split(key)
    x = jax.random.normal(kx, (batch, seq, dim), dtype=jnp.float32)
    params = _make_params(kp, dim, hidden)

    out = jax.block_until_ready(mlp_resnet_block_v2(x, *params))
    ref = _reference(x, *params)
    np.testing.assert_allclose(np.asarray(out), np.asarray(ref), rtol=1e-5, atol=1e-5)

    # Ragged row count (3*5 = 15 rows) exercises the zero-pad + slice path.
    x_odd = jax.random.normal(jax.random.PRNGKey(1), (3, 5, dim), dtype=jnp.float32)
    out_odd = jax.block_until_ready(mlp_resnet_block_v2(x_odd, *params))
    np.testing.assert_allclose(np.asarray(out_odd),
                               np.asarray(_reference(x_odd, *params)),
                               rtol=1e-5, atol=1e-5)

    # --- Test 2: force the streamed-H / multi-row-tile path (accumulator + padding) ---
    dim2, hidden2 = 96, 96 * 4
    x2 = jax.random.normal(jax.random.PRNGKey(2), (5, 8, dim2), dtype=jnp.float32)
    params2 = _make_params(jax.random.PRNGKey(3), dim2, hidden2)
    out2 = jax.block_until_ready(
        mlp_resnet_block_v2(x2, *params2, block_rows=16, h_block=256))
    np.testing.assert_allclose(np.asarray(out2),
                               np.asarray(_reference(x2, *params2)),
                               rtol=1e-5, atol=1e-5)

    # --- Test 3: opt-in bf16 MXU path (f32 accumulation), loose tolerance ---
    out_bf16 = jax.block_until_ready(
        mlp_resnet_block_v2(x, *params, matmul_dtype=jnp.bfloat16))
    np.testing.assert_allclose(np.asarray(out_bf16), np.asarray(ref),
                               rtol=1e-1, atol=1e-1)

    print("KERNEL_OK")
</pallas_src>

<mosaic_0001>
module attributes {stable_mosaic.version = 11 : i64} {
  func.func @_mlp_resnet_block_kernel(%arg0: i32, %arg1: i32, %arg2: memref<16x32xf32, #tpu.memory_space<vmem>>, %arg3: memref<1x32xf32, #tpu.memory_space<vmem>>, %arg4: memref<1x32xf32, #tpu.memory_space<vmem>>, %arg5: memref<32x128xf32, #tpu.memory_space<vmem>>, %arg6: memref<1x128xf32, #tpu.memory_space<vmem>>, %arg7: memref<128x32xf32, #tpu.memory_space<vmem>>, %arg8: memref<1x32xf32, #tpu.memory_space<vmem>>, %arg9: memref<16x32xf32, #tpu.memory_space<vmem>>, %arg10: memref<16x32xf32, #tpu.memory_space<vmem>>, %arg11: memref<16x32xf32, #tpu.memory_space<vmem>>) attributes {dimension_semantics = [#tpu.dimension_semantics<parallel>, #tpu.dimension_semantics<arbitrary>], iteration_bounds = array<i64: 1, 1>, scalar_prefetch = 0 : i64, scratch_operands = 2 : i64, tpu.core_type = #tpu.core_type<tc>, window_params = [{transform_indices = @transform_0, window_bounds = array<i64: 16, 32>}, {pipeline_mode = #tpu.pipeline_mode<synchronous>, transform_indices = @transform_1, window_bounds = array<i64: 1, 32>}, {pipeline_mode = #tpu.pipeline_mode<synchronous>, transform_indices = @transform_2, window_bounds = array<i64: 1, 32>}, {pipeline_mode = #tpu.pipeline_mode<synchronous>, transform_indices = @transform_3, window_bounds = array<i64: 32, 128>}, {pipeline_mode = #tpu.pipeline_mode<synchronous>, transform_indices = @transform_4, window_bounds = array<i64: 1, 128>}, {pipeline_mode = #tpu.pipeline_mode<synchronous>, transform_indices = @transform_5, window_bounds = array<i64: 128, 32>}, {pipeline_mode = #tpu.pipeline_mode<synchronous>, transform_indices = @transform_6, window_bounds = array<i64: 1, 32>}, {transform_indices = @transform_7, window_bounds = array<i64: 16, 32>}]} {
    %c0_i32 = arith.constant 0 : i32
    %0 = arith.cmpi eq, %arg1, %c0_i32 : i32
    %1 = arith.extui %0 : i1 to i32
    %c0_i32_0 = arith.constant 0 : i32
    %2 = arith.cmpi ne, %1, %c0_i32_0 : i32
    scf.if %2 {
      %c0_16 = arith.constant 0 : index
      %c0_17 = arith.constant 0 : index
      %23 = vector.load %arg2[%c0_16, %c0_17] : memref<16x32xf32, #tpu.memory_space<vmem>>, vector<16x32xf32>
      %cst_18 = arith.constant dense<0.000000e+00> : vector<16xf32>
      %24 = vector.multi_reduction <add>, %23, %cst_18 [1] : vector<16x32xf32> to vector<16xf32>
      %25 = vector.shape_cast %24 : vector<16xf32> to vector<16x1xf32>
      %26 = arith.mulf %23, %23 : vector<16x32xf32>
      %cst_19 = arith.constant dense<0.000000e+00> : vector<16xf32>
      %27 = vector.multi_reduction <add>, %26, %cst_19 [1] : vector<16x32xf32> to vector<16xf32>
      %28 = vector.shape_cast %27 : vector<16xf32> to vector<16x1xf32>
      %cst_20 = arith.constant 3.125000e-02 : f32
      %29 = vector.broadcast %cst_20 : f32 to vector<16x1xf32>
      %30 = arith.mulf %25, %29 : vector<16x1xf32>
      %cst_21 = arith.constant 3.125000e-02 : f32
      %31 = vector.broadcast %cst_21 : f32 to vector<16x1xf32>
      %32 = arith.mulf %28, %31 : vector<16x1xf32>
      %33 = arith.mulf %30, %30 : vector<16x1xf32>
      %34 = arith.subf %32, %33 : vector<16x1xf32>
      %cst_22 = arith.constant 0.000000e+00 : f32
      %35 = vector.broadcast %cst_22 : f32 to vector<16x1xf32>
      %36 = arith.maximumf %34, %35 : vector<16x1xf32>
      %37 = vector.broadcast %30 : vector<16x1xf32> to vector<16x32xf32>
      %38 = arith.subf %23, %37 : vector<16x32xf32>
      %cst_23 = arith.constant 9.99999974E-6 : f32
      %39 = vector.broadcast %cst_23 : f32 to vector<16x1xf32>
      %40 = arith.addf %36, %39 : vector<16x1xf32>
      %41 = math.rsqrt %40 : vector<16x1xf32>
      %42 = vector.broadcast %41 : vector<16x1xf32> to vector<16x32xf32>
      %43 = arith.mulf %38, %42 : vector<16x32xf32>
      %c0_24 = arith.constant 0 : index
      %c0_25 = arith.constant 0 : index
      %44 = vector.load %arg3[%c0_24, %c0_25] : memref<1x32xf32, #tpu.memory_space<vmem>>, vector<1x32xf32>
      %45 = vector.broadcast %44 : vector<1x32xf32> to vector<16x32xf32>
      %46 = arith.mulf %43, %45 : vector<16x32xf32>
      %c0_26 = arith.constant 0 : index
      %c0_27 = arith.constant 0 : index
      %47 = vector.load %arg4[%c0_26, %c0_27] : memref<1x32xf32, #tpu.memory_space<vmem>>, vector<1x32xf32>
      %48 = vector.broadcast %47 : vector<1x32xf32> to vector<16x32xf32>
      %49 = arith.addf %46, %48 : vector<16x32xf32>
      %c0_28 = arith.constant 0 : index
      %c0_29 = arith.constant 0 : index
      %50 = vector.load %arg10[%c0_28, %c0_29] : memref<16x32xf32, #tpu.memory_space<vmem>>, vector<16x32xf32>
      tpu.vector_store %arg10[%c0_28, %c0_29], %49 {strides = array<i32>} : memref<16x32xf32, #tpu.memory_space<vmem>>, vector<16x32xf32>,
      %cst_30 = arith.constant 0.000000e+00 : f32
      %51 = vector.broadcast %cst_30 : f32 to vector<16x32xf32>
      %c0_31 = arith.constant 0 : index
      %c0_32 = arith.constant 0 : index
      %52 = vector.load %arg11[%c0_31, %c0_32] : memref<16x32xf32, #tpu.memory_space<vmem>>, vector<16x32xf32>
      tpu.vector_store %arg11[%c0_31, %c0_32], %51 {strides = array<i32>} : memref<16x32xf32, #tpu.memory_space<vmem>>, vector<16x32xf32>,
    } else {
    }
    %c0 = arith.constant 0 : index
    %c0_1 = arith.constant 0 : index
    %3 = vector.load %arg10[%c0, %c0_1] : memref<16x32xf32, #tpu.memory_space<vmem>>, vector<16x32xf32>
    %c0_2 = arith.constant 0 : index
    %c0_3 = arith.constant 0 : index
    %4 = vector.load %arg5[%c0_2, %c0_3] : memref<32x128xf32, #tpu.memory_space<vmem>>, vector<32x128xf32>
    %cst = arith.constant dense<0.000000e+00> : vector<16x128xf32>
    %5 = tpu.matmul %3, %4, %cst {dimension_numbers = #tpu.dot_dimension_numbers<[1], [0], [0], [1], [0, 0, 1, 1], [], []>} : vector<16x32xf32>, vector<32x128xf32>, vector<16x128xf32> -> vector<16x128xf32>
    %c0_4 = arith.constant 0 : index
    %c0_5 = arith.constant 0 : index
    %6 = vector.load %arg6[%c0_4, %c0_5] : memref<1x128xf32, #tpu.memory_space<vmem>>, vector<1x128xf32>
    %7 = vector.broadcast %6 : vector<1x128xf32> to vector<16x128xf32>
    %8 = arith.addf %5, %7 : vector<16x128xf32>
    %9 = arith.negf %8 : vector<16x128xf32>
    %10 = math.exp %9 : vector<16x128xf32>
    %cst_6 = arith.constant 1.000000e+00 : f32
    %11 = vector.broadcast %cst_6 : f32 to vector<16x128xf32>
    %12 = arith.addf %11, %10 : vector<16x128xf32>
    %13 = arith.divf %11, %12 : vector<16x128xf32>
    %14 = arith.mulf %8, %13 : vector<16x128xf32>
    %c0_7 = arith.constant 0 : index
    %c0_8 = arith.constant 0 : index
    %15 = vector.load %arg11[%c0_7, %c0_8] : memref<16x32xf32, #tpu.memory_space<vmem>>, vector<16x32xf32>
    %c0_9 = arith.constant 0 : index
    %c0_10 = arith.constant 0 : index
    %16 = vector.load %arg7[%c0_9, %c0_10] : memref<128x32xf32, #tpu.memory_space<vmem>>, vector<128x32xf32>
    %cst_11 = arith.constant dense<0.000000e+00> : vector<16x32xf32>
    %17 = tpu.matmul %14, %16, %cst_11 {dimension_numbers = #tpu.dot_dimension_numbers<[1], [0], [0], [1], [0, 0, 1, 1], [], []>} : vector<16x128xf32>, vector<128x32xf32>, vector<16x32xf32> -> vector<16x32xf32>
    %18 = arith.addf %15, %17 : vector<16x32xf32>
    %c0_12 = arith.constant 0 : index
    %c0_13 = arith.constant 0 : index
    %19 = vector.load %arg11[%c0_12, %c0_13] : memref<16x32xf32, #tpu.memory_space<vmem>>, vector<16x32xf32>
    tpu.vector_store %arg11[%c0_12, %c0_13], %18 {strides = array<i32>} : memref<16x32xf32, #tpu.memory_space<vmem>>, vector<16x32xf32>,
    %c0_i32_14 = arith.constant 0 : i32
    %20 = arith.cmpi eq, %arg1, %c0_i32_14 : i32
    %21 = arith.extui %20 : i1 to i32
    %c0_i32_15 = arith.constant 0 : i32
    %22 = arith.cmpi ne, %21, %c0_i32_15 : i32
    scf.if %22 {
      %c0_16 = arith.constant 0 : index
      %c0_17 = arith.constant 0 : index
      %23 = vector.load %arg11[%c0_16, %c0_17] : memref<16x32xf32, #tpu.memory_space<vmem>>, vector<16x32xf32>
      %c0_18 = arith.constant 0 : index
      %c0_19 = arith.constant 0 : index
      %24 = vector.load %arg8[%c0_18, %c0_19] : memref<1x32xf32, #tpu.memory_space<vmem>>, vector<1x32xf32>
      %25 = vector.broadcast %24 : vector<1x32xf32> to vector<16x32xf32>
      %26 = arith.addf %23, %25 : vector<16x32xf32>
      %c0_20 = arith.constant 0 : index
      %c0_21 = arith.constant 0 : index
      %27 = vector.load %arg2[%c0_20, %c0_21] : memref<16x32xf32, #tpu.memory_space<vmem>>, vector<16x32xf32>
      %28 = arith.addf %26, %27 : vector<16x32xf32>
      %c0_22 = arith.constant 0 : index
      %c0_23 = arith.constant 0 : index
      %29 = vector.load %arg9[%c0_22, %c0_23] : memref<16x32xf32, #tpu.memory_space<vmem>>, vector<16x32xf32>
      tpu.vector_store %arg9[%c0_22, %c0_23], %28 {strides = array<i32>} : memref<16x32xf32, #tpu.memory_space<vmem>>, vector<16x32xf32>,
    } else {
    }
    return
  }
  func.func @transform_0(%arg0: i32, %arg1: i32) -> (i32, i32) {
    %c0_i32 = arith.constant 0 : i32
    %c0_i32_0 = arith.constant 0 : i32
    return %arg0, %c0_i32 : i32, i32
  }
  func.func @transform_1(%arg0: i32, %arg1: i32) -> (i32, i32) {
    %c0_i32 = arith.constant 0 : i32
    %c0_i32_0 = arith.constant 0 : i32
    %c0_i32_1 = arith.constant 0 : i32
    return %c0_i32, %c0_i32_0 : i32, i32
  }
  func.func @transform_2(%arg0: i32, %arg1: i32) -> (i32, i32) {
    %c0_i32 = arith.constant 0 : i32
    %c0_i32_0 = arith.constant 0 : i32
    %c0_i32_1 = arith.constant 0 : i32
    return %c0_i32, %c0_i32_0 : i32, i32
  }
  func.func @transform_3(%arg0: i32, %arg1: i32) -> (i32, i32) {
    %c0_i32 = arith.constant 0 : i32
    %c0_i32_0 = arith.constant 0 : i32
    return %c0_i32, %arg1 : i32, i32
  }
  func.func @transform_4(%arg0: i32, %arg1: i32) -> (i32, i32) {
    %c0_i32 = arith.constant 0 : i32
    %c0_i32_0 = arith.constant 0 : i32
    return %c0_i32, %arg1 : i32, i32
  }
  func.func @transform_5(%arg0: i32, %arg1: i32) -> (i32, i32) {
    %c0_i32 = arith.constant 0 : i32
    %c0_i32_0 = arith.constant 0 : i32
    return %arg1, %c0_i32 : i32, i32
  }
  func.func @transform_6(%arg0: i32, %arg1: i32) -> (i32, i32) {
    %c0_i32 = arith.constant 0 : i32
    %c0_i32_0 = arith.constant 0 : i32
    %c0_i32_1 = arith.constant 0 : i32
    return %c0_i32, %c0_i32_0 : i32, i32
  }
  func.func @transform_7(%arg0: i32, %arg1: i32) -> (i32, i32) {
    %c0_i32 = arith.constant 0 : i32
    %c0_i32_0 = arith.constant 0 : i32
    return %arg0, %c0_i32 : i32, i32
  }
}

</mosaic_0001>

<llo_original>
// kernel: mlp_resnet_block_v2.1
$region0: #{mlp_resnet_block_v2.1}
  #allocation0 [shape = 'u32[]', space=smem, size = 0x4, offset = 0x4, fixed_abs, tag = 'smem constant byte address 0x4 - core index']
  #allocation1 [shape = 'u32[144,128]{1,0:T(1,128)}', space=vmem, size = 0x12000, scoped, tag = 'internal scratch']
  #allocation2 [shape = 'f32[16,32]{1,0:T(8,128)}', space=vmem, size = 0x2000, scoped, tag = 'scratch operand']
  #allocation3 [shape = 'f32[16,32]{1,0:T(8,128)}', space=vmem, size = 0x2000, scoped, tag = 'scratch operand']
  %s0 = inlined_call_operand.vmem [shape: f32[16,32], index: 0, kind: input, shape index: {}]
  %s1 = inlined_call_operand.vmem [shape: f32[1,32], index: 1, kind: input, shape index: {}]
  %s2 = inlined_call_operand.vmem [shape: f32[1,32], index: 2, kind: input, shape index: {}]
  %s3 = inlined_call_operand.vmem [shape: f32[32,128], index: 3, kind: input, shape index: {}]
  %s4 = inlined_call_operand.vmem [shape: f32[1,128], index: 4, kind: input, shape index: {}]
  %s5 = inlined_call_operand.vmem [shape: f32[128,32], index: 5, kind: input, shape index: {}]
  %s6 = inlined_call_operand.vmem [shape: f32[1,32], index: 6, kind: input, shape index: {}]
  %s7 = inlined_call_operand.hbm [shape: f32[16,32], index: 7, kind: output, shape index: {}]
  %s8 = sld [smem:[#allocation0]]
  $region46: #{mlp_resnet_block_v2.1} parent=0
    _
  %s10 = ssub.s32 1, %s8
  %s11 = scalar_select 0, %s10, %s8
  $region1: #{mlp_resnet_block_v2.1} parent=0
    #allocation4 [shape = 'u8[8192]{0}', space=vmem, size = 0x2000, scoped, tag = 'output window, operand 0, single buffered']
    #allocation5 [shape = 's32[1]{0}', space=sflag, size = 0x4, scoped, tag = 'scoped memory for mlp_resnet_block_v2.1']
    %12 = vsyncpa [#allocation5], 0
    // Predicated region
    $region2: #{mlp_resnet_block_v2.1} parent=1 // pred_check
      _
    $region3: #{mlp_resnet_block_v2.1} parent=1 // pred_check_branch
      %14 = sbr.rel (0) target = $region5
    $region4: #{mlp_resnet_block_v2.1} parent=1 // pred_region
      _
    $region5: #{mlp_resnet_block_v2.1} parent=1 // pred_fallthru
      _
    // Predicated region
    $region6: #{mlp_resnet_block_v2.1} parent=1 // pred_check
      _
    $region7: #{mlp_resnet_block_v2.1} parent=1 // pred_check_branch
      %16 = sbr.rel (0) target = $region9
    $region8: #{mlp_resnet_block_v2.1} parent=1 // pred_region
      _
    $region9: #{mlp_resnet_block_v2.1} parent=1 // pred_fallthru
      _
    // Predicated region
    $region10: #{mlp_resnet_block_v2.1} parent=1 // pred_check
      _
    $region11: #{mlp_resnet_block_v2.1} parent=1 // pred_check_branch
      %18 = sbr.rel (0) target = $region13
    $region12: #{mlp_resnet_block_v2.1} parent=1 // pred_region
      _
    $region13: #{mlp_resnet_block_v2.1} parent=1 // pred_fallthru
      _
    // Predicated region
    $region14: #{mlp_resnet_block_v2.1} parent=1 // pred_check
      _
    $region15: #{mlp_resnet_block_v2.1} parent=1 // pred_check_branch
      %20 = sbr.rel (0) target = $region17
    $region16: #{mlp_resnet_block_v2.1} parent=1 // pred_region
      _
    $region17: #{mlp_resnet_block_v2.1} parent=1 // pred_fallthru
      _
    // Predicated region
    $region18: #{mlp_resnet_block_v2.1} parent=1 // pred_check
      _
    $region19: #{mlp_resnet_block_v2.1} parent=1 // pred_check_branch
      %22 = sbr.rel (0) target = $region21
    $region20: #{mlp_resnet_block_v2.1} parent=1 // pred_region
      _
    $region21: #{mlp_resnet_block_v2.1} parent=1 // pred_fallthru
      _
    // Predicated region
    $region22: #{mlp_resnet_block_v2.1} parent=1 // pred_check
      _
    $region23: #{mlp_resnet_block_v2.1} parent=1 // pred_check_branch
      %24 = sbr.rel (0) target = $region25
    $region24: #{mlp_resnet_block_v2.1} parent=1 // pred_region
      _
    $region25: #{mlp_resnet_block_v2.1} parent=1 // pred_fallthru
      _
    // Predicated region
    $region26: #{mlp_resnet_block_v2.1} parent=1 // pred_check
      _
    $region27: #{mlp_resnet_block_v2.1} parent=1 // pred_check_branch
      %26 = sbr.rel (0) target = $region29
    $region28: #{mlp_resnet_block_v2.1} parent=1 // pred_region
      _
    $region29: #{mlp_resnet_block_v2.1} parent=1 // pred_fallthru
      _
    %p27 = scmp.eq.s32.totalorder 0, 0
    // Predicated region
    $region30: #{mlp_resnet_block_v2.1} parent=1 // pred_check
      %p28 = pneg %p27
    $region31: #{mlp_resnet_block_v2.1} parent=1 // pred_check_branch
      %30 = sbr.rel (%p28) target = $region33
    $region32: #{mlp_resnet_block_v2.1} parent=1 // pred_region
      %v31 = vld [vmem:[%s0] sm:$0xff]
      %v32 = vld [vmem:[%s0 + $0x8] sm:$0xff]
      %vm33 = vcmask 261120
      %v34 = vsel %vm33, %v31, 0.0
      %35 = vadd.xlane.f32.xlu0 %v34
      %v36 = vpop.xlane.xlu0 %35
      %v37 = vsel %vm33, %v32, 0.0
      %38 = vadd.xlane.f32.xlu0 %v37
      %v39 = vpop.xlane.xlu0 %38
      %v40 = vmul.f32 %v31, %v31
      %v41 = vmul.f32 %v32, %v32
      %v42 = vsel %vm33, %v40, 0.0
      %43 = vadd.xlane.f32.xlu0 %v42
      %v44 = vpop.xlane.xlu0 %43
      %v45 = vsel %vm33, %v41, 0.0
      %46 = vadd.xlane.f32.xlu0 %v45
      %v47 = vpop.xlane.xlu0 %46
      %v48 = vmul.f32 %v36, 0.03125
      %v49 = vmul.f32 %v39, 0.03125
      %v50 = vmul.f32 %v44, 0.03125
      %v51 = vmul.f32 %v47, 0.03125
      %v52 = vmul.f32 %v48, %v48
      %v53 = vmul.f32 %v49, %v49
      %v54 = vsub.f32 %v50, %v52
      %v55 = vsub.f32 %v51, %v53
      %v56 = vmax.f32 %v54, 0.0
      %v57 = vmax.f32 %v55, 0.0
      %v58 = vsub.f32 %v31, %v48
      %v59 = vsub.f32 %v32, %v49
      %v60 = vadd.f32 %v56, 1e-05
      %v61 = vadd.f32 %v57, 1e-05
      %v62 = vrsqrt.pop %v60
      %v63 = vrsqrt.pop %v61
      %v64 = vmul.f32 %v58, %v62
      %v65 = vmul.f32 %v59, %v63
      %v66 = vld [vmem:[%s1] sm:$0x1]
      %v68 = vlaneseq
      %v69 = vshrl.u32 %v68, 7
      %v70 = vsub.s32 0, %v69
      %v71 = vrot.slane %v66, %v70
      %v73 = vmul.f32 %v64, %v71
      %v74 = vmul.f32 %v65, %v71
      %v75 = vld [vmem:[%s2] sm:$0x1]
      %v77 = vlaneseq
      %v78 = vshrl.u32 %v77, 7
      %v79 = vsub.s32 0, %v78
      %v80 = vrot.slane %v75, %v79
      %v82 = vadd.f32 %v73, %v80
      %v83 = vadd.f32 %v74, %v80
      %84 = vst.msk [vmem:[#allocation2] sm:$0xff] %vm33, %v82
      %85 = vst.msk [vmem:[#allocation2 + $0x8] sm:$0xff] %vm33, %v83
      %86 = vst.msk [vmem:[#allocation3] sm:$0xff] %vm33, 0.0
      %87 = vst.msk [vmem:[#allocation3 + $0x8] sm:$0xff] %vm33, 0.0
    $region33: #{mlp_resnet_block_v2.1} parent=1 // pred_fallthru
      _
    %v88 = vld [vmem:[#allocation2] sm:$0xff]
    %v89 = vld [vmem:[#allocation2 + $0x8] sm:$0xff]
    %v90 = vld [vmem:[%s3] sm:$0xff]
    %v91 = vld [vmem:[%s3 + $0x8] sm:$0xff]
    %v92 = vld [vmem:[%s3 + $0x10] sm:$0xff]
    %v93 = vld [vmem:[%s3 + $0x18] sm:$0xff]
    %v94 = vld [vmem:[%s4] sm:$0x1]
    %v96 = vlaneseq
    %v97 = vshrl.u32 %v96, 7
    %v98 = vsub.s32 0, %v97
    %v99 = vrot.slane %v94, %v98
    %vm101 = vcmask 261120
    %v103 = vsel %vm101, %v88, 0
    %v106 = vsel %vm101, %v89, 0
    %108 = vmatprep.subr.mxu0 0.0
    %109 = vmatpush1.msra.mxu0 0.0
    %110 = vmatprep.subr.mxu0 0.0
    %111 = vmatpush1.msra.mxu0 0.0
    %112 = vmatprep.subr.mxu0 0.0
    %113 = vmatpush1.msra.mxu0 0.0
    %114 = vmatprep.subr.mxu0 0.0
    %115 = vmatpush1.msra.mxu0 0.0
    %116 = vmatprep.subr.mxu0 0.0
    %117 = vmatpush1.msra.mxu0 0.0
    %118 = vmatprep.subr.mxu0 0.0
    %119 = vmatpush1.msra.mxu0 0.0
    %120 = vmatprep.subr.mxu0 0.0
    %121 = vmatpush1.msra.mxu0 0.0
    %122 = vmatprep.subr.mxu0 0.0
    %123 = vmatpush1.msra.mxu0 0.0
    %124 = vmatprep.subr.mxu0 0.0
    %125 = vmatpush1.msra.mxu0 0.0
    %126 = vmatprep.subr.mxu0 0.0
    %127 = vmatpush1.msra.mxu0 0.0
    %128 = vmatprep.subr.mxu0 0.0
    %129 = vmatpush1.msra.mxu0 0.0
    %130 = vmatprep.subr.mxu0 0.0
    %131 = vmatpush1.msra.mxu0 0.0
    %132 = vmatprep.subr.mxu0 0.0
    %133 = vmatpush1.msra.mxu0 %v93
    %134 = vmatprep.subr.mxu0 0.0
    %135 = vmatpush1.msra.mxu0 %v92
    %136 = vmatprep.subr.mxu0 0.0
    %137 = vmatpush1.msra.mxu0 %v91
    %138 = vmatprep.subr.mxu0 0.0
    %139 = vmatpush1.msra.mxu0 %v90
    %140 = vmatprep.subr.mxu0 0.0
    %141 = vmatpush2.msra.mxu0 0.0
    %142 = vmatprep.subr.mxu0 0.0
    %143 = vmatpush2.msra.mxu0 0.0
    %144 = vmatprep.subr.mxu0 0.0
    %145 = vmatpush2.msra.mxu0 0.0
    %146 = vmatprep.subr.mxu0 0.0
    %147 = vmatpush2.msra.mxu0 0.0
    %148 = vmatprep.subr.mxu0 0.0
    %149 = vmatpush2.msra.mxu0 0.0
    %150 = vmatprep.subr.mxu0 0.0
    %151 = vmatpush2.msra.mxu0 0.0
    %152 = vmatprep.subr.mxu0 0.0
    %153 = vmatpush2.msra.mxu0 0.0
    %154 = vmatprep.subr.mxu0 0.0
    %155 = vmatpush2.msra.mxu0 0.0
    %156 = vmatprep.subr.mxu0 0.0
    %157 = vmatpush2.msra.mxu0 0.0
    %158 = vmatprep.subr.mxu0 0.0
    %159 = vmatpush2.msra.mxu0 0.0
    %160 = vmatprep.subr.mxu0 0.0
    %161 = vmatpush2.msra.mxu0 0.0
    %162 = vmatprep.subr.mxu0 0.0
    %163 = vmatpush2.msra.mxu0 0.0
    %164 = vmatprep.subr.mxu0 0.0
    %165 = vmatpush2.msra.mxu0 0.0
    %166 = vmatprep.subr.mxu0 0.0
    %167 = vmatpush2.msra.mxu0 0.0
    %168 = vmatprep.subr.mxu0 0.0
    %169 = vmatpush2.msra.mxu0 0.0
    %170 = vmatprep.subr.mxu0 0.0
    %171 = vmatpush2.msra.mxu0 0.0
    %172 = vmatprep.mubr.f32.mxu0 0.0
    %173 = vmatmul.mubr.f32.gmra.mxu0 %v103
    %v174 = vpop.f32.mrf.mxu0
    %v175 = vadd.f32 %v99, %v174
    %v176 = vpop.f32.mrf.mxu0
    %177 = vmatprep.mubr.f32.mxu0 0.0
    %178 = vmatmul.mubr.f32.gmra.mxu0 %v106
    %v179 = vpop.f32.mrf.mxu0
    %v180 = vadd.f32 %v99, %v179
    %v181 = vpop.f32.mrf.mxu0
    %182 = vdwg.mxu0
    %v183 = vxor.u32 %v175, 2147483648
    %v184 = vxor.u32 %v180, 2147483648
    %v185 = vmul.f32 %v183, 1.442695
    %v186 = vpow.pop %v185
    %v187 = vmul.f32 %v184, 1.442695
    %v188 = vpow.pop %v187
    %v189 = vadd.f32 %v186, 1.0
    %v190 = vadd.f32 %v188, 1.0
    %v191 = vrcp.pop %v189
    %v192 = vmul.f32 1.0, %v191
    %v193 = vrcp.pop %v190
    %v194 = vmul.f32 1.0, %v193
    %v195 = vmul.f32 %v175, %v192
    %v196 = vmul.f32 %v180, %v194
    %v197 = vld [vmem:[#allocation3] sm:$0xff]
    %v198 = vld [vmem:[#allocation3 + $0x8] sm:$0xff]
    %v199 = vld [vmem:[%s5] sm:$0xff]
    %v200 = vld [vmem:[%s5 + $0x8] sm:$0xff]
    %v201 = vld [vmem:[%s5 + $0x10] sm:$0xff]
    %v202 = vld [vmem:[%s5 + $0x18] sm:$0xff]
    %v203 = vld [vmem:[%s5 + $0x20] sm:$0xff]
    %v204 = vld [vmem:[%s5 + $0x28] sm:$0xff]
    %v205 = vld [vmem:[%s5 + $0x30] sm:$0xff]
    %v206 = vld [vmem:[%s5 + $0x38] sm:$0xff]
    %v207 = vld [vmem:[%s5 + $0x40] sm:$0xff]
    %v208 = vld [vmem:[%s5 + $0x48] sm:$0xff]
    %v209 = vld [vmem:[%s5 + $0x50] sm:$0xff]
    %v210 = vld [vmem:[%s5 + $0x58] sm:$0xff]
    %v211 = vld [vmem:[%s5 + $0x60] sm:$0xff]
    %v212 = vld [vmem:[%s5 + $0x68] sm:$0xff]
    %v213 = vld [vmem:[%s5 + $0x70] sm:$0xff]
    %v214 = vld [vmem:[%s5 + $0x78] sm:$0xff]
    %215 = vmatprep.subr.mxu0 0.0
    %216 = vmatpush1.msra.mxu0 %v214
    %217 = vmatprep.subr.mxu0 0.0
    %218 = vmatpush1.msra.mxu0 %v213
    %219 = vmatprep.subr.mxu0 0.0
    %220 = vmatpush1.msra.mxu0 %v212
    %221 = vmatprep.subr.mxu0 0.0
    %222 = vmatpush1.msra.mxu0 %v211
    %223 = vmatprep.subr.mxu0 0.0
    %224 = vmatpush1.msra.mxu0 %v210
    %225 = vmatprep.subr.mxu0 0.0
    %226 = vmatpush1.msra.mxu0 %v209
    %227 = vmatprep.subr.mxu0 0.0
    %228 = vmatpush1.msra.mxu0 %v208
    %229 = vmatprep.subr.mxu0 0.0
    %230 = vmatpush1.msra.mxu0 %v207
    %231 = vmatprep.subr.mxu0 0.0
    %232 = vmatpush1.msra.mxu0 %v206
    %233 = vmatprep.subr.mxu0 0.0
    %234 = vmatpush1.msra.mxu0 %v205
    %235 = vmatprep.subr.mxu0 0.0
    %236 = vmatpush1.msra.mxu0 %v204
    %237 = vmatprep.subr.mxu0 0.0
    %238 = vmatpush1.msra.mxu0 %v203
    %239 = vmatprep.subr.mxu0 0.0
    %240 = vmatpush1.msra.mxu0 %v202
    %241 = vmatprep.subr.mxu0 0.0
    %242 = vmatpush1.msra.mxu0 %v201
    %243 = vmatprep.subr.mxu0 0.0
    %244 = vmatpush1.msra.mxu0 %v200
    %245 = vmatprep.subr.mxu0 0.0
    %246 = vmatpush1.msra.mxu0 %v199
    %247 = vmatprep.subr.mxu0 0.0
    %248 = vmatpush2.msra.mxu0 0.0
    %249 = vmatprep.subr.mxu0 0.0
    %250 = vmatpush2.msra.mxu0 0.0
    %251 = vmatprep.subr.mxu0 0.0
    %252 = vmatpush2.msra.mxu0 0.0
    %253 = vmatprep.subr.mxu0 0.0
    %254 = vmatpush2.msra.mxu0 0.0
    %255 = vmatprep.subr.mxu0 0.0
    %256 = vmatpush2.msra.mxu0 0.0
    %257 = vmatprep.subr.mxu0 0.0
    %258 = vmatpush2.msra.mxu0 0.0
    %259 = vmatprep.subr.mxu0 0.0
    %260 = vmatpush2.msra.mxu0 0.0
    %261 = vmatprep.subr.mxu0 0.0
    %262 = vmatpush2.msra.mxu0 0.0
    %263 = vmatprep.subr.mxu0 0.0
    %264 = vmatpush2.msra.mxu0 0.0
    %265 = vmatprep.subr.mxu0 0.0
    %266 = vmatpush2.msra.mxu0 0.0
    %267 = vmatprep.subr.mxu0 0.0
    %268 = vmatpush2.msra.mxu0 0.0
    %269 = vmatprep.subr.mxu0 0.0
    %270 = vmatpush2.msra.mxu0 0.0
    %271 = vmatprep.subr.mxu0 0.0
    %272 = vmatpush2.msra.mxu0 0.0
    %273 = vmatprep.subr.mxu0 0.0
    %274 = vmatpush2.msra.mxu0 0.0
    %275 = vmatprep.subr.mxu0 0.0
    %276 = vmatpush2.msra.mxu0 0.0
    %277 = vmatprep.subr.mxu0 0.0
    %278 = vmatpush2.msra.mxu0 0.0
    %279 = vmatprep.mubr.f32.mxu0 0.0
    %280 = vmatmul.mubr.f32.gmra.mxu0 %v195
    %v281 = vpop.f32.mrf.mxu0
    %v282 = vadd.f32 0.0, %v281
    %v283 = vpop.f32.mrf.mxu0
    %284 = vmatprep.mubr.f32.mxu0 0.0
    %285 = vmatmul.mubr.f32.gmra.mxu0 %v196
    %v286 = vpop.f32.mrf.mxu0
    %v287 = vadd.f32 0.0, %v286
    %v288 = vpop.f32.mrf.mxu0
    %289 = vdwg.mxu0
    %v290 = vadd.f32 %v197, %v282
    %v291 = vadd.f32 %v198, %v287
    %292 = vst.msk [vmem:[#allocation3] sm:$0xff] %vm101, %v290
    %293 = vst.msk [vmem:[#allocation3 + $0x8] sm:$0xff] %vm101, %v291
    // Predicated region
    $region34: #{mlp_resnet_block_v2.1} parent=1 // pred_check
      %p294 = pneg %p27
    $region35: #{mlp_resnet_block_v2.1} parent=1 // pred_check_branch
      %296 = sbr.rel (%p294) target = $region37
    $region36: #{mlp_resnet_block_v2.1} parent=1 // pred_region
      %v297 = vld [vmem:[#allocation3] sm:$0xff]
      %v298 = vld [vmem:[#allocation3 + $0x8] sm:$0xff]
      %v299 = vld [vmem:[%s6] sm:$0x1]
      %v301 = vlaneseq
      %v302 = vshrl.u32 %v301, 7
      %v303 = vsub.s32 0, %v302
      %v304 = vrot.slane %v299, %v303
      %v306 = vadd.f32 %v297, %v304
      %v307 = vadd.f32 %v298, %v304
      %v308 = vld [vmem:[%s0] sm:$0xff]
      %v309 = vld [vmem:[%s0 + $0x8] sm:$0xff]
      %v310 = vadd.f32 %v306, %v308
      %v311 = vadd.f32 %v307, %v309
      %312 = vst.msk [vmem:[#allocation4] sm:$0xff] %vm101, %v310
      %313 = vst.msk [vmem:[#allocation4 + $0x8] sm:$0xff] %vm101, %v311
    $region37: #{mlp_resnet_block_v2.1} parent=1 // pred_fallthru
      _
    // Predicated region
    $region38: #{mlp_resnet_block_v2.1} parent=1 // pred_check
      _
    $region39: #{mlp_resnet_block_v2.1} parent=1 // pred_check_branch
      %315 = sbr.rel (0) target = $region41
    $region40: #{mlp_resnet_block_v2.1} parent=1 // pred_region
      %s317 = ssub.s32 256, 256
      %318 = vsyncadd [#allocation5], %s317
      %s319 = sshll.u32 [#allocation4], 4
      %s320 = int_to_ptr.vmem [resolvable:$true] %s319
      %325 = dma.vmem_to_hbm [thread:$0]  %s320, 256, %s7, [#allocation5], 128, 128, 8
    $region41: #{mlp_resnet_block_v2.1} parent=1 // pred_fallthru
      _
    // Predicated region
    $region42: #{mlp_resnet_block_v2.1} parent=1 // pred_check
      _
    $region43: #{mlp_resnet_block_v2.1} parent=1 // pred_check_branch
      %327 = sbr.rel (0) target = $region45
    $region44: #{mlp_resnet_block_v2.1} parent=1 // pred_region
      %328 = dma.done [#allocation5], 256
    $region45: #{mlp_resnet_block_v2.1} parent=1 // pred_fallthru
      _
    %329 = vsyncpa [#allocation5], 1

</llo_original>
